<compile_context>
chip_gen: v7x
topology: tpu7x:2x2x1
jax: 0.10.0
libtpu: 0.0.40
codegen_flags: <defaults>
</compile_context>

<pallas_src>
import functools

import jax
import jax.numpy as jnp
from jax.experimental import pallas as pl
from jax.experimental.pallas import tpu as pltpu


def _hbm_copy_kernel(x_hbm, o_hbm, sems, *, n_chunks, rows_per_chunk):
    """Direct HBM->HBM copy of a (batch, chw) slab via async DMA(s)."""
    copies = []
    for c in range(n_chunks):           # static Python loop (n_chunks is trace-time)
        r0 = c * rows_per_chunk          # static offset
        cp = pltpu.make_async_copy(
            x_hbm.at[pl.ds(r0, rows_per_chunk), :],
            o_hbm.at[pl.ds(r0, rows_per_chunk), :],
            sems.at[c],
        )
        cp.start()
        copies.append(cp)
    for cp in copies:
        cp.wait()


def split_time(x: jax.Array, times: int) -> jax.Array:
    """Pallas implementation of SplitTime.forward."""
    batch, channels, height, width = x.shape
    assert batch % times == 0, "batch must be divisible by times (view(-1, ...))"
    out_batch = batch // times
    chw = channels * height * width

    # Free metadata reshape: the kernel copies identically-shaped 2D slabs.
    x2 = x.reshape(batch, chw)

    itemsize = jnp.dtype(x.dtype).itemsize
    total_bytes = batch * chw * itemsize

    # Split into a handful of concurrent DMAs only when the copy is big enough
    # for queue-level overlap to matter; otherwise a single DMA.
    n_chunks = 4 if (total_bytes >= (1 << 20) and batch % 4 == 0) else 1
    rows_per_chunk = batch // n_chunks

    kernel = functools.partial(
        _hbm_copy_kernel, n_chunks=n_chunks, rows_per_chunk=rows_per_chunk
    )

    out2 = pl.pallas_call(
        kernel,
        out_shape=jax.ShapeDtypeStruct((batch, chw), x.dtype),
        in_specs=[pl.BlockSpec(memory_space=pl.ANY)],   # raw HBM ref, no auto-DMA
        out_specs=pl.BlockSpec(memory_space=pl.ANY),    # raw HBM ref, DMA'd by us
        scratch_shapes=[pltpu.SemaphoreType.DMA((n_chunks,))],
        cost_estimate=pl.CostEstimate(
            flops=0, transcendentals=0, bytes_accessed=2 * total_bytes
        ),
    )(x2)

    # Free metadata reshape to the PyTorch output shape.
    return out2.reshape(out_batch, times, channels, height, width)


if __name__ == "__main__":
    key = jax.random.PRNGKey(0)

    # Small shapes consistent with the module: batch=4, channels=4, 16x16,
    # times=2  ->  output (2, 2, 4, 16, 16).
    batch, channels, height, width = 4, 4, 16, 16
    times = 2

    x = jax.random.normal(key, (batch, channels, height, width), dtype=jnp.float32)

    out = split_time(x, times)
    out = jax.block_until_ready(out)

    # Reference: pure reshape (what torch .view does on contiguous NCHW).
    ref = x.reshape(batch // times, times, channels, height, width)

    assert out.shape == (batch // times, times, channels, height, width), out.shape
    assert out.dtype == x.dtype
    assert jnp.array_equal(out, ref), "mismatch vs reference reshape"

    print("KERNEL_OK")
</pallas_src>

<mosaic_0001>
module attributes {stable_mosaic.version = 11 : i64} {
  func.func @_hbm_copy_kernel(%arg0: memref<4x1024xf32, #tpu.memory_space<any>>, %arg1: memref<4x1024xf32, #tpu.memory_space<any>>, %arg2: memref<1x!tpu.dma_semaphore, #tpu.memory_space<semaphore_mem>>) attributes {dimension_semantics = [], scalar_prefetch = 0 : i64, scratch_operands = 1 : i64, tpu.core_type = #tpu.core_type<tc>} {
    %c0_i32 = arith.constant 0 : i32
    %c0_i32_0 = arith.constant 0 : i32
    %c0_i32_1 = arith.constant 0 : i32
    %0 = tpu.memref_slice %arg0[%c0_i32_0, %c0_i32_1] : memref<4x1024xf32, #tpu.memory_space<any>> -> memref<4x1024xf32, #tpu.memory_space<any>>
    %c0_i32_2 = arith.constant 0 : i32
    %c0_i32_3 = arith.constant 0 : i32
    %1 = tpu.memref_slice %arg1[%c0_i32_2, %c0_i32_3] : memref<4x1024xf32, #tpu.memory_space<any>> -> memref<4x1024xf32, #tpu.memory_space<any>>
    %2 = tpu.memref_slice %arg2[%c0_i32] : memref<1x!tpu.dma_semaphore, #tpu.memory_space<semaphore_mem>> -> memref<1x!tpu.dma_semaphore, #tpu.memory_space<semaphore_mem>>
    %3 = tpu.memref_squeeze %2 : memref<1x!tpu.dma_semaphore, #tpu.memory_space<semaphore_mem>> -> memref<!tpu.dma_semaphore, #tpu.memory_space<semaphore_mem>>
    tpu.enqueue_dma source(%0 : memref<4x1024xf32, #tpu.memory_space<any>>) target(%1 : memref<4x1024xf32, #tpu.memory_space<any>>) target_semaphore(%3 : memref<!tpu.dma_semaphore, #tpu.memory_space<semaphore_mem>>)
    %c0_i32_4 = arith.constant 0 : i32
    %c0_i32_5 = arith.constant 0 : i32
    %c0_i32_6 = arith.constant 0 : i32
    %4 = tpu.memref_slice %arg0[%c0_i32_5, %c0_i32_6] : memref<4x1024xf32, #tpu.memory_space<any>> -> memref<4x1024xf32, #tpu.memory_space<any>>
    %c0_i32_7 = arith.constant 0 : i32
    %c0_i32_8 = arith.constant 0 : i32
    %5 = tpu.memref_slice %arg1[%c0_i32_7, %c0_i32_8] : memref<4x1024xf32, #tpu.memory_space<any>> -> memref<4x1024xf32, #tpu.memory_space<any>>
    %6 = tpu.memref_slice %arg2[%c0_i32_4] : memref<1x!tpu.dma_semaphore, #tpu.memory_space<semaphore_mem>> -> memref<1x!tpu.dma_semaphore, #tpu.memory_space<semaphore_mem>>
    %7 = tpu.memref_squeeze %6 : memref<1x!tpu.dma_semaphore, #tpu.memory_space<semaphore_mem>> -> memref<!tpu.dma_semaphore, #tpu.memory_space<semaphore_mem>>
    tpu.wait_dma2 semaphore(%7 : memref<!tpu.dma_semaphore, #tpu.memory_space<semaphore_mem>>) src(%4 : memref<4x1024xf32, #tpu.memory_space<any>>) dst(%5 : memref<4x1024xf32, #tpu.memory_space<any>>)
    return
  }
}

</mosaic_0001>

<llo_original>
// kernel: tpu_custom_call.1
$region0: #{tpu_custom_call.1}
  #allocation0 [shape = 'u32[]', space=smem, size = 0x4, offset = 0x4, fixed_abs, tag = 'smem constant byte address 0x4 - core index']
  #allocation1 [shape = 'u32[144,128]{1,0:T(1,128)}', space=vmem, size = 0x12000, scoped, tag = 'internal scratch']
  #allocation2 [shape = 's32[1]{0}', space=sflag, size = 0x4, scoped, tag = 'scratch operand']
  #allocation3 [shape = 's32[]', space=sflag, size = 0x4, offset = 0, fixed_abs, tag = 'sflag constant byte address 0x0 - dummy sync flag']
  #allocation4 [shape = 'u32[0]{0}', space=smem, size = 0, offset = 0, fixed_abs, tag = 'smem constant byte address 0x0 - null']
  %s0 = inlined_call_operand.hbm [shape: f32[4,1024], index: 0, kind: input, shape index: {}]
  %s1 = inlined_call_operand.hbm [shape: f32[4,1024], index: 1, kind: output, shape index: {}]
  %s2 = sld [smem:[#allocation0]]
  $region2: #{tpu_custom_call.1} parent=0
    _
  %s4 = ssub.s32 1, %s2
  %s5 = scalar_select 0, %s4, %s2
  %s7 = sshll.u32 1, 14
  %s8 = sxor.u32 4294967295, %s7
  %s11 = sshll.u32 3, 24
  %s12 = sxor.u32 4294967295, %s11
  %s13 = sand.u32 0, %s12
  %s15 = sor.u32 %s13, 0
  %18 = dma.general %s0, 512, %s1, [#allocation2], [#allocation3], [#allocation4], %s15, 0
  %s19 = smul.u32 4, 1
  %s20 = smul.u32 %s19, 8
  %s21 = sshll.u32 %s20, 4
  %22 = dma.done [#allocation2], %s21
  %23 = vsyncmov [#allocation2]
  %s24 = vpop.sfrf %23
  %p25 = scmp.eq.s32.totalorder %s24, 0
  %p26 = pneg %p25
  %28 = shalt.err (%p26)

</llo_original>
